<compile_context>
chip_gen: v7x
topology: tpu7x:2x2x1
jax: 0.10.0
libtpu: 0.0.40
codegen_flags: <defaults>
</compile_context>

<pallas_src>
import functools

import jax
import jax.numpy as jnp
import numpy as np
from jax.experimental import pallas as pl
from jax.experimental.pallas import tpu as pltpu


def _round_up(v, m):
    return (v + m - 1) // m * m


def _cdiv(a, b):
    return -(-a // b)


def _contrastive_kernel(x_ref, lbl_ref, out_ref, *, s, margin, eps):
    # x_ref   : (TILE_G*S, dim)  group-major rows [q, s_1, ..., s_{S-1}] per group
    # lbl_ref : (TILE_G, S) f32  labels; -1 marks query rows / padded / stale groups
    # out_ref : (1, 8, 128) f32  per-tile partial sum, broadcast across the block
    tile_g = lbl_ref.shape[0]

    # Query row of every group: one sublane-strided read, reused for all j.
    xq = x_ref[pl.ds(0, tile_g, stride=s), :].astype(jnp.float32)      # (TILE_G, dim)

    acc = jnp.zeros((tile_g, 1), jnp.float32)
    for j in range(1, s):                                              # s is tiny; unrolled
        xn = x_ref[pl.ds(j, tile_g, stride=s), :].astype(jnp.float32)  # (TILE_G, dim)
        lbl = lbl_ref[:, j:j + 1]                                      # (TILE_G, 1)
        diff = (xq - xn) + eps                                         # matches torch: (xp - xn) + eps
        # dim-reduction on VPU/XLU; if profiling on v7x shows this slot saturating
        # before HBM, it can be moved to the idle MXU (jnp.dot(diff*diff, ones)).
        d2 = jnp.sum(diff * diff, axis=-1, keepdims=True)              # (TILE_G, 1) == D^2
        d = jnp.sqrt(d2)
        h = jnp.maximum(margin - d, 0.0)
        y = jnp.where(lbl > 0.5, 0.5 * d2, 0.5 * h * h)                # labels are {0, 1}
        acc = acc + jnp.where(lbl >= 0.0, y, 0.0)                      # drop padded / stale groups

    out_ref[...] = jnp.full(out_ref.shape, jnp.sum(acc), dtype=jnp.float32)


def _vmem_limit_bytes():
    kind = ""
    try:
        kind = jax.devices()[0].device_kind.lower()
    except Exception:
        pass
    if "v5" in kind or "v6" in kind:
        return 96 * 1024 * 1024   # 128 MiB physical VMEM on v5e/v6e
    return 48 * 1024 * 1024       # v7x has 64 MiB per TensorCore; also safe fallback


def _pick_tile_groups(nq, s, dim, itemsize, max_tile_groups):
    vmem_limit = _vmem_limit_bytes()
    data_budget = (vmem_limit * 2) // 3            # headroom for compiler scratch / output
    dim_pad = _round_up(dim, 128)
    per_group_in = s * dim_pad * itemsize          # one pipeline buffer of one group
    per_group_tmp = 4 * dim_pad * 4                # ~4 live (TILE_G, dim) f32 temporaries
    cap = data_budget // (2 * per_group_in + per_group_tmp)
    cap = max(8, (cap // 8) * 8)
    if max_tile_groups is not None:
        cap = min(cap, max(8, (int(max_tile_groups) // 8) * 8))
    # Keep ~>=4 grid steps so the 'parallel' axis can shard across v7x's 2 TCs.
    tile_g = min(cap, max(8, _round_up(_cdiv(nq, 4), 8)))
    if tile_g >= nq:
        tile_g = nq                                # single full-extent tile (tiny nq)
    return int(tile_g), int(vmem_limit)


@functools.partial(jax.jit, static_argnames=("nq", "s", "margin", "eps", "max_tile_groups"))
def contrastive_loss(x, label, *, nq, s, margin=0.7, eps=1e-6, max_tile_groups=None):
    """x: (nq*s, dim); label: (nq*s,) with -1 on query rows, {0,1} otherwise.

    nq and s are static; this function is jittable and does not sync to host.
    Assumes the regular [query, S-1 samples] group layout implied by the
    PyTorch module (use contrastive_loss_auto to infer/validate from label).
    """
    n, dim = x.shape
    if s < 2 or n != nq * s:
        raise ValueError("expected x with nq*s rows and s >= 2")

    tile_g, vmem_limit = _pick_tile_groups(nq, s, dim, np.dtype(x.dtype).itemsize,
                                           max_tile_groups)
    num_tiles = _cdiv(nq, tile_g)
    nq_pad = num_tiles * tile_g

    lbl2 = jnp.reshape(label.astype(jnp.float32), (nq, s))
    if nq_pad != nq:
        # Only the tiny label array is padded.  x is NOT copied: the last grid
        # step reads a partial block and its stale rows are masked by the -1
        # labels below (select does not propagate NaN/Inf from masked lanes).
        lbl2 = jnp.concatenate(
            [lbl2, jnp.full((nq_pad - nq, s), -1.0, jnp.float32)], axis=0)

    # TODO(synk): for dim < 128 the lanes are under-utilized (up to 4x); a
    # lane-packed (nq, S*dim) view with pltpu.roll alignment would recover it.
    partials = pl.pallas_call(
        functools.partial(_contrastive_kernel, s=s, margin=float(margin), eps=float(eps)),
        out_shape=jax.ShapeDtypeStruct((num_tiles, 8, 128), jnp.float32),
        grid=(num_tiles,),
        in_specs=[
            pl.BlockSpec((tile_g * s, dim), lambda i: (i, 0)),
            pl.BlockSpec((tile_g, s), lambda i: (i, 0)),
        ],
        out_specs=pl.BlockSpec((1, 8, 128), lambda i: (i, 0, 0)),
        compiler_params=pltpu.CompilerParams(
            dimension_semantics=("parallel",),
            vmem_limit_bytes=int(vmem_limit),
        ),
    )(x, lbl2)

    # Trivial final reduction of the per-tile partial sums.
    return jnp.sum(partials[:, 0, 0])


def contrastive_loss_auto(x, label, margin=0.7, eps=1e-6, max_tile_groups=None):
    """Convenience wrapper: infers nq / S from a host-visible label.

    Forces a device->host sync; prefer contrastive_loss(..., nq=, s=) in hot
    or jitted paths.
    """
    label_np = np.asarray(label)
    n = x.shape[0]
    nq = int(np.sum(label_np == -1))
    if nq == 0 or n % nq != 0:
        raise ValueError("label must contain queries (-1) and N must be divisible by nq")
    s = n // nq
    lab2 = label_np.reshape(nq, s)
    if not (np.all(lab2[:, 0] == -1) and np.all(lab2[:, 1:] != -1)):
        # TODO(synk): irregular query placement needs a data-dependent gather path.
        raise ValueError("expected regular [query, S-1 samples] group layout")
    return contrastive_loss(x, jnp.asarray(label), nq=nq, s=s,
                            margin=margin, eps=eps, max_tile_groups=max_tile_groups)


def _reference_loss(x, label, margin=0.7, eps=1e-6):
    """Pure-JAX transliteration of the PyTorch forward (for verification)."""
    label_np = np.asarray(label)
    n, dim = x.shape
    nq = int(np.sum(label_np == -1))
    s = n // nq
    xp = jnp.repeat(x[::s], s - 1, axis=0)
    idx = np.nonzero(label_np != -1)[0]
    xn = x[idx]
    lbl = jnp.asarray(label_np[idx], jnp.float32)
    diff = (xp - xn) + eps
    D = jnp.sqrt(jnp.sum(diff * diff, axis=-1))
    y = 0.5 * lbl * D ** 2 + 0.5 * (1.0 - lbl) * jnp.maximum(margin - D, 0.0) ** 2
    return jnp.sum(y)


if __name__ == "__main__":
    key0, key1 = jax.random.split(jax.random.PRNGKey(0))

    # Test 1: tiny single-tile config with dim < 128 (nq=2 groups of S=4, dim=32).
    NQ1, S1, DIM1 = 2, 4, 32
    x1 = jax.random.normal(key0, (NQ1 * S1, DIM1), dtype=jnp.float32)
    label1 = jnp.asarray([-1, 1, 0, 0, -1, 1, 0, 0], dtype=jnp.float32)
    out1 = jax.block_until_ready(contrastive_loss_auto(x1, label1, margin=0.7, eps=1e-6))
    ref1 = _reference_loss(x1, label1, margin=0.7, eps=1e-6)
    np.testing.assert_allclose(np.asarray(out1), np.asarray(ref1), rtol=1e-4, atol=1e-4)

    # Test 2: multi-tile, lane-dense dim, partial (masked) last tile:
    # nq=20 groups of S=4, dim=256; 8 groups/tile -> 3 tiles, last tile has 4 real groups.
    NQ2, S2, DIM2 = 20, 4, 256
    x2 = jax.random.normal(key1, (NQ2 * S2, DIM2), dtype=jnp.float32)
    label2 = jnp.tile(jnp.asarray([-1.0, 1.0, 0.0, 0.0], dtype=jnp.float32), NQ2)
    out2 = jax.block_until_ready(
        contrastive_loss(x2, label2, nq=NQ2, s=S2, margin=0.7, eps=1e-6, max_tile_groups=8))
    ref2 = _reference_loss(x2, label2, margin=0.7, eps=1e-6)
    np.testing.assert_allclose(np.asarray(out2), np.asarray(ref2), rtol=1e-4, atol=1e-4)

    print("KERNEL_OK")
</pallas_src>

<mosaic_0001>
module attributes {stable_mosaic.version = 11 : i64} {
  func.func @_contrastive_kernel(%arg0: i32, %arg1: memref<8x32xf32, #tpu.memory_space<vmem>>, %arg2: memref<2x4xf32, #tpu.memory_space<vmem>>, %arg3: memref<1x8x128xf32, #tpu.memory_space<vmem>>) attributes {dimension_semantics = [#tpu.dimension_semantics<parallel>], iteration_bounds = array<i64: 1>, scalar_prefetch = 0 : i64, scratch_operands = 0 : i64, tpu.core_type = #tpu.core_type<tc>, window_params = [{transform_indices = @transform_0, window_bounds = array<i64: 8, 32>}, {transform_indices = @transform_1, window_bounds = array<i64: 2, 4>}, {transform_indices = @transform_2, window_bounds = array<i64: 1, 8, 128>}]} {
    %c0 = arith.constant 0 : index
    %c0_0 = arith.constant 0 : index
    %0 = tpu.strided_load %arg1[%c0, %c0_0] {strides = array<i32: 4, 1>} : memref<8x32xf32, #tpu.memory_space<vmem>>, vector<2x32xf32>
    %cst = arith.constant 0.000000e+00 : f32
    %1 = vector.broadcast %cst : f32 to vector<2x1xf32>
    %c1 = arith.constant 1 : index
    %c0_1 = arith.constant 0 : index
    %2 = tpu.strided_load %arg1[%c1, %c0_1] {strides = array<i32: 4, 1>} : memref<8x32xf32, #tpu.memory_space<vmem>>, vector<2x32xf32>
    %c0_2 = arith.constant 0 : index
    %c1_3 = arith.constant 1 : index
    %3 = vector.load %arg2[%c0_2, %c1_3] : memref<2x4xf32, #tpu.memory_space<vmem>>, vector<2x1xf32>
    %4 = arith.subf %0, %2 : vector<2x32xf32>
    %cst_4 = arith.constant 9.99999997E-7 : f32
    %5 = vector.broadcast %cst_4 : f32 to vector<2x32xf32>
    %6 = arith.addf %4, %5 : vector<2x32xf32>
    %7 = arith.mulf %6, %6 : vector<2x32xf32>
    %cst_5 = arith.constant dense<0.000000e+00> : vector<2xf32>
    %8 = vector.multi_reduction <add>, %7, %cst_5 [1] : vector<2x32xf32> to vector<2xf32>
    %9 = vector.shape_cast %8 : vector<2xf32> to vector<2x1xf32>
    %10 = math.sqrt %9 : vector<2x1xf32>
    %cst_6 = arith.constant 0.699999988 : f32
    %11 = vector.broadcast %cst_6 : f32 to vector<2x1xf32>
    %12 = arith.subf %11, %10 : vector<2x1xf32>
    %cst_7 = arith.constant 0.000000e+00 : f32
    %13 = vector.broadcast %cst_7 : f32 to vector<2x1xf32>
    %14 = arith.maximumf %12, %13 : vector<2x1xf32>
    %cst_8 = arith.constant 5.000000e-01 : f32
    %15 = vector.broadcast %cst_8 : f32 to vector<2x1xf32>
    %16 = arith.cmpf ogt, %3, %15 : vector<2x1xf32>
    %cst_9 = arith.constant 5.000000e-01 : f32
    %17 = vector.broadcast %cst_9 : f32 to vector<2x1xf32>
    %18 = arith.mulf %17, %9 : vector<2x1xf32>
    %cst_10 = arith.constant 5.000000e-01 : f32
    %19 = vector.broadcast %cst_10 : f32 to vector<2x1xf32>
    %20 = arith.mulf %19, %14 : vector<2x1xf32>
    %21 = arith.mulf %20, %14 : vector<2x1xf32>
    %22 = arith.select %16, %18, %21 : vector<2x1xi1>, vector<2x1xf32>
    %cst_11 = arith.constant 0.000000e+00 : f32
    %23 = vector.broadcast %cst_11 : f32 to vector<2x1xf32>
    %24 = arith.cmpf oge, %3, %23 : vector<2x1xf32>
    %cst_12 = arith.constant 0.000000e+00 : f32
    %25 = vector.broadcast %cst_12 : f32 to vector<2x1xf32>
    %26 = arith.select %24, %22, %25 : vector<2x1xi1>, vector<2x1xf32>
    %27 = arith.addf %1, %26 : vector<2x1xf32>
    %c2 = arith.constant 2 : index
    %c0_13 = arith.constant 0 : index
    %28 = tpu.strided_load %arg1[%c2, %c0_13] {strides = array<i32: 4, 1>} : memref<8x32xf32, #tpu.memory_space<vmem>>, vector<2x32xf32>
    %c0_14 = arith.constant 0 : index
    %c2_15 = arith.constant 2 : index
    %29 = vector.load %arg2[%c0_14, %c2_15] : memref<2x4xf32, #tpu.memory_space<vmem>>, vector<2x1xf32>
    %30 = arith.subf %0, %28 : vector<2x32xf32>
    %cst_16 = arith.constant 9.99999997E-7 : f32
    %31 = vector.broadcast %cst_16 : f32 to vector<2x32xf32>
    %32 = arith.addf %30, %31 : vector<2x32xf32>
    %33 = arith.mulf %32, %32 : vector<2x32xf32>
    %cst_17 = arith.constant dense<0.000000e+00> : vector<2xf32>
    %34 = vector.multi_reduction <add>, %33, %cst_17 [1] : vector<2x32xf32> to vector<2xf32>
    %35 = vector.shape_cast %34 : vector<2xf32> to vector<2x1xf32>
    %36 = math.sqrt %35 : vector<2x1xf32>
    %cst_18 = arith.constant 0.699999988 : f32
    %37 = vector.broadcast %cst_18 : f32 to vector<2x1xf32>
    %38 = arith.subf %37, %36 : vector<2x1xf32>
    %cst_19 = arith.constant 0.000000e+00 : f32
    %39 = vector.broadcast %cst_19 : f32 to vector<2x1xf32>
    %40 = arith.maximumf %38, %39 : vector<2x1xf32>
    %cst_20 = arith.constant 5.000000e-01 : f32
    %41 = vector.broadcast %cst_20 : f32 to vector<2x1xf32>
    %42 = arith.cmpf ogt, %29, %41 : vector<2x1xf32>
    %cst_21 = arith.constant 5.000000e-01 : f32
    %43 = vector.broadcast %cst_21 : f32 to vector<2x1xf32>
    %44 = arith.mulf %43, %35 : vector<2x1xf32>
    %cst_22 = arith.constant 5.000000e-01 : f32
    %45 = vector.broadcast %cst_22 : f32 to vector<2x1xf32>
    %46 = arith.mulf %45, %40 : vector<2x1xf32>
    %47 = arith.mulf %46, %40 : vector<2x1xf32>
    %48 = arith.select %42, %44, %47 : vector<2x1xi1>, vector<2x1xf32>
    %cst_23 = arith.constant 0.000000e+00 : f32
    %49 = vector.broadcast %cst_23 : f32 to vector<2x1xf32>
    %50 = arith.cmpf oge, %29, %49 : vector<2x1xf32>
    %cst_24 = arith.constant 0.000000e+00 : f32
    %51 = vector.broadcast %cst_24 : f32 to vector<2x1xf32>
    %52 = arith.select %50, %48, %51 : vector<2x1xi1>, vector<2x1xf32>
    %53 = arith.addf %27, %52 : vector<2x1xf32>
    %c3 = arith.constant 3 : index
    %c0_25 = arith.constant 0 : index
    %54 = tpu.strided_load %arg1[%c3, %c0_25] {strides = array<i32: 4, 1>} : memref<8x32xf32, #tpu.memory_space<vmem>>, vector<2x32xf32>
    %c0_26 = arith.constant 0 : index
    %c3_27 = arith.constant 3 : index
    %55 = vector.load %arg2[%c0_26, %c3_27] : memref<2x4xf32, #tpu.memory_space<vmem>>, vector<2x1xf32>
    %56 = arith.subf %0, %54 : vector<2x32xf32>
    %cst_28 = arith.constant 9.99999997E-7 : f32
    %57 = vector.broadcast %cst_28 : f32 to vector<2x32xf32>
    %58 = arith.addf %56, %57 : vector<2x32xf32>
    %59 = arith.mulf %58, %58 : vector<2x32xf32>
    %cst_29 = arith.constant dense<0.000000e+00> : vector<2xf32>
    %60 = vector.multi_reduction <add>, %59, %cst_29 [1] : vector<2x32xf32> to vector<2xf32>
    %61 = vector.shape_cast %60 : vector<2xf32> to vector<2x1xf32>
    %62 = math.sqrt %61 : vector<2x1xf32>
    %cst_30 = arith.constant 0.699999988 : f32
    %63 = vector.broadcast %cst_30 : f32 to vector<2x1xf32>
    %64 = arith.subf %63, %62 : vector<2x1xf32>
    %cst_31 = arith.constant 0.000000e+00 : f32
    %65 = vector.broadcast %cst_31 : f32 to vector<2x1xf32>
    %66 = arith.maximumf %64, %65 : vector<2x1xf32>
    %cst_32 = arith.constant 5.000000e-01 : f32
    %67 = vector.broadcast %cst_32 : f32 to vector<2x1xf32>
    %68 = arith.cmpf ogt, %55, %67 : vector<2x1xf32>
    %cst_33 = arith.constant 5.000000e-01 : f32
    %69 = vector.broadcast %cst_33 : f32 to vector<2x1xf32>
    %70 = arith.mulf %69, %61 : vector<2x1xf32>
    %cst_34 = arith.constant 5.000000e-01 : f32
    %71 = vector.broadcast %cst_34 : f32 to vector<2x1xf32>
    %72 = arith.mulf %71, %66 : vector<2x1xf32>
    %73 = arith.mulf %72, %66 : vector<2x1xf32>
    %74 = arith.select %68, %70, %73 : vector<2x1xi1>, vector<2x1xf32>
    %cst_35 = arith.constant 0.000000e+00 : f32
    %75 = vector.broadcast %cst_35 : f32 to vector<2x1xf32>
    %76 = arith.cmpf oge, %55, %75 : vector<2x1xf32>
    %cst_36 = arith.constant 0.000000e+00 : f32
    %77 = vector.broadcast %cst_36 : f32 to vector<2x1xf32>
    %78 = arith.select %76, %74, %77 : vector<2x1xi1>, vector<2x1xf32>
    %79 = arith.addf %53, %78 : vector<2x1xf32>
    %80 = vector.shape_cast %79 : vector<2x1xf32> to vector<1x2x1xf32>
    %cst_37 = arith.constant dense<0.000000e+00> : vector<1xf32>
    %81 = vector.multi_reduction <add>, %80, %cst_37 [1, 2] : vector<1x2x1xf32> to vector<1xf32>
    %82 = vector.shape_cast %81 : vector<1xf32> to vector<1x1x1xf32>
    %83 = vector.extract %82[0, 0, 0] : f32 from vector<1x1x1xf32>
    %84 = vector.broadcast %83 : f32 to vector<1x8x128xf32>
    %c0_38 = arith.constant 0 : index
    %c0_39 = arith.constant 0 : index
    %c0_40 = arith.constant 0 : index
    %85 = vector.load %arg3[%c0_38, %c0_39, %c0_40] : memref<1x8x128xf32, #tpu.memory_space<vmem>>, vector<1x8x128xf32>
    tpu.vector_store %arg3[%c0_38, %c0_39, %c0_40], %84 {strides = array<i32>} : memref<1x8x128xf32, #tpu.memory_space<vmem>>, vector<1x8x128xf32>,
    return
  }
  func.func @transform_0(%arg0: i32) -> (i32, i32) {
    %c0_i32 = arith.constant 0 : i32
    %c0_i32_0 = arith.constant 0 : i32
    return %arg0, %c0_i32 : i32, i32
  }
  func.func @transform_1(%arg0: i32) -> (i32, i32) {
    %c0_i32 = arith.constant 0 : i32
    %c0_i32_0 = arith.constant 0 : i32
    return %arg0, %c0_i32 : i32, i32
  }
  func.func @transform_2(%arg0: i32) -> (i32, i32, i32) {
    %c0_i32 = arith.constant 0 : i32
    %c0_i32_0 = arith.constant 0 : i32
    %c0_i32_1 = arith.constant 0 : i32
    return %arg0, %c0_i32, %c0_i32_0 : i32, i32, i32
  }
}

</mosaic_0001>

<llo_original>
// kernel: contrastive_loss.1
$region0: #{contrastive_loss.1}
  #allocation0 [shape = 'u32[]', space=smem, size = 0x4, offset = 0x4, fixed_abs, tag = 'smem constant byte address 0x4 - core index']
  #allocation1 [shape = 'u32[144,128]{1,0:T(1,128)}', space=vmem, size = 0x12000, scoped, tag = 'internal scratch']
  %s0 = inlined_call_operand.hbm [shape: f32[8,32], index: 0, kind: input, shape index: {}]
  %s1 = inlined_call_operand.vmem [shape: f32[2,4], index: 1, kind: input, shape index: {}]
  %s2 = inlined_call_operand.vmem [shape: f32[1,8,128], index: 2, kind: output, shape index: {}]
  %s3 = sld [smem:[#allocation0]]
  $region22: #{contrastive_loss.1} parent=0
    _
  %s5 = ssub.s32 1, %s3
  %s6 = scalar_select 0, %s5, %s3
  $region1: #{contrastive_loss.1} parent=0
    #allocation2 [shape = 'u8[4096]{0}', space=vmem, size = 0x1000, scoped, tag = 'input window, operand 0, single buffered']
    #allocation3 [shape = 's32[1]{0}', space=sflag, size = 0x4, scoped, tag = 'scoped memory for contrastive_loss.1']
    %7 = vsyncpa [#allocation3], 0
    // Predicated region
    $region2: #{contrastive_loss.1} parent=1 // pred_check
      _
    $region3: #{contrastive_loss.1} parent=1 // pred_check_branch
      %9 = sbr.rel (0) target = $region5
    $region4: #{contrastive_loss.1} parent=1 // pred_region
      %s11 = ssub.s32 128, 128
      %12 = vsyncadd [#allocation3], %s11
      %s14 = sshll.u32 [#allocation2], 4
      %s15 = int_to_ptr.vmem [resolvable:$true] %s14
      %17 = dma.hbm_to_vmem [thread:$0]  %s0, 128, %s15, [#allocation3]
    $region5: #{contrastive_loss.1} parent=1 // pred_fallthru
      _
    // Predicated region
    $region6: #{contrastive_loss.1} parent=1 // pred_check
      _
    $region7: #{contrastive_loss.1} parent=1 // pred_check_branch
      %19 = sbr.rel (0) target = $region9
    $region8: #{contrastive_loss.1} parent=1 // pred_region
      _
    $region9: #{contrastive_loss.1} parent=1 // pred_fallthru
      _
    // Predicated region
    $region10: #{contrastive_loss.1} parent=1 // pred_check
      _
    $region11: #{contrastive_loss.1} parent=1 // pred_check_branch
      %21 = sbr.rel (0) target = $region13
    $region12: #{contrastive_loss.1} parent=1 // pred_region
      %22 = dma.done [#allocation3], 128
    $region13: #{contrastive_loss.1} parent=1 // pred_fallthru
      _
    %v23 = vld [vmem:[#allocation2] ss:$4 sm:$0x3]
    %s24 = scalar_lea.vmem [#allocation2], 1
    %v25 = vld [vmem:[%s24] ss:$4 sm:$0x3]
    %v26 = vld [vmem:[%s1] sm:$0x3]
    %v27 = vsub.f32 %v23, %v25
    %v28 = vadd.f32 %v27, 1e-06
    %v29 = vmul.f32 %v28, %v28
    %vm30 = vcmask 254976
    %v31 = vsel %vm30, %v29, 0.0
    %32 = vadd.xlane.f32.xlu0 %v31
    %v33 = vpop.xlane.xlu0 %32
    %v34 = vrsqrt.pop %v33
    %v35 = vmul.f32 %v33, %v34
    %vm36 = vcmp.eq.f32.partialorder %v33, inf
    %v37 = vsel %vm36, %v33, %v35
    %vm38 = vcmp.eq.f32.partialorder %v33, 0.0
    %v39 = vand.u32 %v33, 2147483648
    %v40 = vsel %vm38, %v39, %v37
    %v41 = vsub.f32 0.7, %v40
    %v42 = vmax.f32 %v41, 0.0
    %vm43 = vcmp.gt.f32.partialorder %v26, 0.5
    %v44 = vmul.f32 %v33, 0.5
    %v45 = vmul.f32 %v42, 0.5
    %v46 = vmul.f32 %v45, %v42
    %v47 = vsel %vm43, %v44, %v46
    %vm48 = vcmp.ge.f32.partialorder %v26, 0.0
    %v49 = vsel %vm48, %v47, 0.0
    %v50 = vadd.f32 %v49, 0.0
    %s51 = scalar_lea.vmem [#allocation2], 2
    %v52 = vld [vmem:[%s51] ss:$4 sm:$0x3]
    %v53 = vsub.f32 %v23, %v52
    %v54 = vadd.f32 %v53, 1e-06
    %v55 = vmul.f32 %v54, %v54
    %v56 = vsel %vm30, %v55, 0.0
    %57 = vadd.xlane.f32.xlu0 %v56
    %v58 = vpop.xlane.xlu0 %57
    %v59 = vrsqrt.pop %v58
    %v60 = vmul.f32 %v58, %v59
    %vm61 = vcmp.eq.f32.partialorder %v58, inf
    %v62 = vsel %vm61, %v58, %v60
    %vm63 = vcmp.eq.f32.partialorder %v58, 0.0
    %v64 = vand.u32 %v58, 2147483648
    %v65 = vsel %vm63, %v64, %v62
    %v66 = vsub.f32 0.7, %v65
    %v67 = vmax.f32 %v66, 0.0
    %v68 = vmul.f32 %v58, 0.5
    %v69 = vmul.f32 %v67, 0.5
    %v70 = vmul.f32 %v69, %v67
    %v71 = vsel %vm43, %v68, %v70
    %v72 = vsel %vm48, %v71, 0.0
    %74 = vrot.lane.b32.xlu0 %v72, 127
    %v75 = vpop.permute.xlu0 %74
    %v77 = vadd.f32 %v50, %v75
    %s78 = scalar_lea.vmem [#allocation2], 3
    %v79 = vld [vmem:[%s78] ss:$4 sm:$0x3]
    %v80 = vsub.f32 %v23, %v79
    %v81 = vadd.f32 %v80, 1e-06
    %v82 = vmul.f32 %v81, %v81
    %v83 = vsel %vm30, %v82, 0.0
    %84 = vadd.xlane.f32.xlu0 %v83
    %v85 = vpop.xlane.xlu0 %84
    %v86 = vrsqrt.pop %v85
    %v87 = vmul.f32 %v85, %v86
    %vm88 = vcmp.eq.f32.partialorder %v85, inf
    %v89 = vsel %vm88, %v85, %v87
    %vm90 = vcmp.eq.f32.partialorder %v85, 0.0
    %v91 = vand.u32 %v85, 2147483648
    %v92 = vsel %vm90, %v91, %v89
    %v93 = vsub.f32 0.7, %v92
    %v94 = vmax.f32 %v93, 0.0
    %v95 = vmul.f32 %v85, 0.5
    %v96 = vmul.f32 %v94, 0.5
    %v97 = vmul.f32 %v96, %v94
    %v98 = vsel %vm43, %v95, %v97
    %v99 = vsel %vm48, %v98, 0.0
    %101 = vrot.lane.b32.xlu0 %v99, 126
    %v102 = vpop.permute.xlu0 %101
    %v104 = vadd.f32 %v77, %v102
    %106 = vrot.lane.b32.xlu0 %v104, 127
    %v107 = vpop.permute.xlu0 %106
    %vm109 = vcmask 1024
    %v110 = vsel %vm109, %v107, 0.0
    %111 = vadd.xlane.f32.xlu0 %v110
    %v112 = vpop.xlane.xlu0 %111
    %v113 = vrot.slane %v112, 4
    %v114 = vadd.f32 %v112, %v113
    %v115 = vrot.slane %v114, 2
    %v116 = vadd.f32 %v114, %v115
    %v117 = vrot.slane %v116, 1
    %v118 = vadd.f32 %v116, %v117
    %s119 = vtos %v118
    %v120 = vstv %s119
    %121 = vst [vmem:[%s2] sm:$0xff] %v120
    // Predicated region
    $region14: #{contrastive_loss.1} parent=1 // pred_check
      _
    $region15: #{contrastive_loss.1} parent=1 // pred_check_branch
      %123 = sbr.rel (0) target = $region17
    $region16: #{contrastive_loss.1} parent=1 // pred_region
      _
    $region17: #{contrastive_loss.1} parent=1 // pred_fallthru
      _
    // Predicated region
    $region18: #{contrastive_loss.1} parent=1 // pred_check
      _
    $region19: #{contrastive_loss.1} parent=1 // pred_check_branch
      %125 = sbr.rel (0) target = $region21
    $region20: #{contrastive_loss.1} parent=1 // pred_region
      _
    $region21: #{contrastive_loss.1} parent=1 // pred_fallthru
      _
    %126 = vsyncpa [#allocation3], 1

</llo_original>
